<compile_context>
chip_gen: v6e
topology: v6e:2x2x1
jax: 0.10.0
libtpu: 0.0.40
codegen_flags: <defaults>
</compile_context>

<pallas_src>
import math

import jax
import jax.numpy as jnp
from jax import lax
from jax.experimental import pallas as pl
from jax.experimental.pallas import tpu as pltpu

D = 2                       # in/out features of the Linear; trailing dims of x1
_INV_SQRT2 = 0.7071067811865476
_SIG2 = 0.8807970779778823  # sigmoid(2.0), trace-time constant
_CH = 8                     # sublane rows per inner chunk (one vreg per temp)


def _erf(x):
    """Abramowitz-Stegun 7.1.26 erf (|err| <= 1.5e-7): exp + VPU ops only."""
    ax = jnp.abs(x)
    t = 1.0 / (1.0 + 0.3275911 * ax)
    poly = t * (0.254829592 + t * (-0.284496736 + t * (1.421413741
               + t * (-1.453152027 + t * 1.061405429))))
    y = 1.0 - poly * jnp.exp(-(ax * ax))
    return jnp.where(x < 0.0, -y, y)


def _gelu(x):
    # TODO(synk): exact lax.erf GELU is not used in-kernel because erf lowering
    # in Mosaic is not relied upon; this polynomial matches it to ~1.5e-7.
    return 0.5 * x * (1.0 + _erf(x * _INV_SQRT2))


def model_kernel(x_ref, w_ref, b_ref, o_ref):
    # x_ref / o_ref: (4, block_rows, 128) f32.  Axis-0 row k holds element k of
    # x1[b].reshape(4) for batch b = (block_offset + sublane_row) * 128 + lane.
    # All math is dense elementwise VPU/EUP work on full (8,128) vregs.
    w00 = w_ref[0]
    w01 = w_ref[1]
    w10 = w_ref[2]
    w11 = w_ref[3]
    b0 = b_ref[0]
    b1 = b_ref[1]

    n_chunks = x_ref.shape[1] // _CH

    # Chunk loop keeps every temporary at one vreg (8x128) -> no VMEM spills.
    @pl.loop(0, n_chunks)
    def _(c):
        off = pl.multiple_of(c * _CH, _CH)
        rows = pl.ds(off, _CH)

        x00 = x_ref[0, rows, :]
        x01 = x_ref[1, rows, :]
        x10 = x_ref[2, rows, :]
        x11 = x_ref[3, rows, :]

        # v1 = x1.permute(0, 2, 1): static row reorder, zero cost.
        a00, a01, a10, a11 = x00, x10, x01, x11

        # v2 = F.linear(v1, W, b): 2x2 contraction unrolled to VPU FMAs.
        v2_00 = a00 * w00 + a01 * w01 + b0
        v2_01 = a00 * w10 + a01 * w11 + b1
        v2_10 = a10 * w00 + a11 * w01 + b0
        v2_11 = a10 * w10 + a11 * w11 + b1

        # x3 = (gelu(v2) + 0.5).floor(); int64 emulated as integer-valued f32.
        t00 = jnp.floor(_gelu(v2_00) + 0.5)
        t01 = jnp.floor(_gelu(v2_01) + 0.5)
        t10 = jnp.floor(_gelu(v2_10) + 0.5)
        t11 = jnp.floor(_gelu(v2_11) + 0.5)

        # r_j = max(softmax(x3[j,:], -1)) = 1 / (1 + exp(-|t_j0 - t_j1|)).
        r0 = 1.0 / (1.0 + jnp.exp(-jnp.abs(t00 - t01)))
        r1 = 1.0 / (1.0 + jnp.exp(-jnp.abs(t10 - t11)))

        # v3 = v1 * x4  (column j of v1 scaled by r_j).
        c00 = a00 * r0
        c01 = a01 * r1
        c10 = a10 * r0
        c11 = a11 * r1

        # v5 = clamp(floor(.),0,1) - clamp(floor(.),-1,0) == 1[floor(.) != 0]
        #    == 1[(c < 0) | (c >= 1)]   -- pure selects, no floor/clamp.
        def unit(t):
            return jnp.where((t < 0.0) | (t >= 1.0), 1.0, 0.0)

        v5_00 = unit(c00)
        v5_01 = unit(c01)
        v5_10 = unit(c10)
        v5_11 = unit(c11)

        # v7 = softmax(2*v5, -1); v5 in {0,1} => only 3 outcomes per row:
        #   v7_j0 = 0.5 + (v5_j0 - v5_j1) * (sigmoid(2) - 0.5), v7_j1 = 1-v7_j0.
        cst = _SIG2 - 0.5
        v7_00 = 0.5 + (v5_00 - v5_01) * cst
        v7_01 = 1.0 - v7_00
        v7_10 = 0.5 + (v5_10 - v5_11) * cst
        v7_11 = 1.0 - v7_10

        # F.linear(v5, v8): out[b,0,i,j] = sum_k v5[b,i,k] * v7[b,j,k].
        o_ref[0, rows, :] = v5_00 * v7_00 + v5_01 * v7_01
        o_ref[1, rows, :] = v5_00 * v7_10 + v5_01 * v7_11
        o_ref[2, rows, :] = v5_10 * v7_00 + v5_11 * v7_01
        o_ref[3, rows, :] = v5_10 * v7_10 + v5_11 * v7_11


def _round_up(n, m):
    return ((n + m - 1) // m) * m


def model_forward(x1, w, b, *, max_block_rows=512):
    """x1: (B, 2, 2) f32;  w: (2, 2);  b: (2,)  ->  (B, 1, 2, 2) f32."""
    B = x1.shape[0]
    assert x1.shape[1:] == (D, D), x1.shape

    # ---- batch tiling: 128 batch elems per sublane-row, _CH-row chunks ------
    max_block_rows = _round_up(max(max_block_rows, _CH), _CH)
    rows = pl.cdiv(B, 128)
    rows8 = _round_up(rows, _CH)
    block_rows = min(max_block_rows, rows8)
    if rows8 > 64:
        # Keep >= 2 grid steps so ("parallel",) can shard across v7x's 2 TCs.
        block_rows = min(block_rows, _round_up(pl.cdiv(rows8, 2), _CH))
    assert block_rows % _CH == 0
    rows_padded = _round_up(rows8, block_rows)
    Bp = rows_padded * 128

    # ---- SoA relayout: batch dense on (sublane, lane), matrix elems on axis 0.
    # TODO(synk): this transpose (and the inverse on the output) is an extra
    # HBM pass each; in a real pipeline the (4, rows, 128) SoA layout should be
    # carried across the surrounding ops instead of converting at the boundary.
    x_flat = x1.reshape(B, D * D)
    if Bp != B:
        x_flat = jnp.pad(x_flat, ((0, Bp - B), (0, 0)))
    x_soa = jnp.transpose(x_flat, (1, 0)).reshape(D * D, rows_padded, 128)

    out_soa = pl.pallas_call(
        model_kernel,
        out_shape=jax.ShapeDtypeStruct((D * D, rows_padded, 128), jnp.float32),
        grid=(rows_padded // block_rows,),
        in_specs=[
            pl.BlockSpec((D * D, block_rows, 128), lambda i: (0, i, 0)),
            pl.BlockSpec(memory_space=pltpu.MemorySpace.SMEM),  # W flat (4,)
            pl.BlockSpec(memory_space=pltpu.MemorySpace.SMEM),  # bias (2,)
        ],
        out_specs=pl.BlockSpec((D * D, block_rows, 128), lambda i: (0, i, 0)),
        compiler_params=pltpu.CompilerParams(
            dimension_semantics=("parallel",),
            vmem_limit_bytes=32 * 1024 * 1024),
    )(x_soa, w.reshape(D * D), b)

    out_flat = jnp.transpose(out_soa, (1, 2, 0)).reshape(Bp, D * D)[:B]
    return out_flat.reshape(B, 1, D, D)


def reference(x1, w, b):
    """Pure-JAX reference of the same (float-emulated) semantics."""
    v1 = jnp.transpose(x1, (0, 2, 1))
    v2 = jnp.einsum("bik,jk->bij", v1, w, precision="highest") + b
    v3 = _gelu(v2)                      # same erf formulation as the kernel
    x3 = jnp.floor(v3 + 0.5)            # int64 emulated as integer-valued f32
    v4 = jax.nn.softmax(x3, axis=-1)
    x4 = jnp.max(v4, axis=-1)[:, None, :]
    v3b = v1 * x4
    f = jnp.floor(v3b)
    v5 = jnp.clip(f, 0.0, 1.0) - jnp.clip(f, -1.0, 0.0)
    v7 = jax.nn.softmax(v5 * 2.0, axis=-1)
    v8 = v7[:, None, :, :]
    return jnp.einsum("bik,bujk->buij", v5, v8, precision="highest")


if __name__ == "__main__":
    key = jax.random.PRNGKey(0)
    kx1, kx2, kx3, kw, kb = jax.random.split(key, 5)

    # nn.Linear(2, 2)-style parameter init.
    bound = 1.0 / math.sqrt(D)
    w = jax.random.uniform(kw, (D, D), minval=-bound, maxval=bound,
                           dtype=jnp.float32)
    b = jax.random.uniform(kb, (D,), minval=-bound, maxval=bound,
                           dtype=jnp.float32)

    # Module-sized input (1, 2, 2) plus batches exercising lane/sublane
    # padding, the multi-chunk path and the multi-block grid path.
    cases = [
        (1, kx1, {}),                           # module shape
        (300, kx2, {}),                         # padding path
        (1536, kx3, {}),                        # 1 block, 2 inner chunks
        (1536, kx3, dict(max_block_rows=8)),    # 2 grid blocks
    ]
    for B, kx, kwargs in cases:
        x1 = jax.random.normal(kx, (B, D, D), dtype=jnp.float32)
        out = jax.block_until_ready(model_forward(x1, w, b, **kwargs))
        ref = reference(x1, w, b)
        assert out.shape == (B, 1, D, D), out.shape
        assert jnp.allclose(out, ref, rtol=1e-5, atol=1e-5), (
            B, kwargs, float(jnp.max(jnp.abs(out - ref))))

    print("KERNEL_OK")
</pallas_src>

<mosaic_0001>
module attributes {stable_mosaic.version = 11 : i64} {
  func.func @model_kernel(%arg0: i32, %arg1: memref<4x8x128xf32, #tpu.memory_space<vmem>>, %arg2: memref<4xf32, #tpu.memory_space<smem>>, %arg3: memref<2xf32, #tpu.memory_space<smem>>, %arg4: memref<4x8x128xf32, #tpu.memory_space<vmem>>) attributes {dimension_semantics = [#tpu.dimension_semantics<parallel>], iteration_bounds = array<i64: 1>, scalar_prefetch = 0 : i64, scratch_operands = 0 : i64, tpu.core_type = #tpu.core_type<tc>, window_params = [{transform_indices = @transform_0, window_bounds = array<i64: 4, 8, 128>}, {transform_indices = @transform_1, window_bounds = array<i64: 4>}, {transform_indices = @transform_2, window_bounds = array<i64: 2>}, {transform_indices = @transform_3, window_bounds = array<i64: 4, 8, 128>}]} {
    %c0 = arith.constant 0 : index
    %0 = memref.load %arg2[%c0] : memref<4xf32, #tpu.memory_space<smem>>
    %c1 = arith.constant 1 : index
    %1 = memref.load %arg2[%c1] : memref<4xf32, #tpu.memory_space<smem>>
    %c2 = arith.constant 2 : index
    %2 = memref.load %arg2[%c2] : memref<4xf32, #tpu.memory_space<smem>>
    %c3 = arith.constant 3 : index
    %3 = memref.load %arg2[%c3] : memref<4xf32, #tpu.memory_space<smem>>
    %c0_0 = arith.constant 0 : index
    %4 = memref.load %arg3[%c0_0] : memref<2xf32, #tpu.memory_space<smem>>
    %c1_1 = arith.constant 1 : index
    %5 = memref.load %arg3[%c1_1] : memref<2xf32, #tpu.memory_space<smem>>
    %c0_i32 = arith.constant 0 : i32
    %c1_i32 = arith.constant 1 : i32
    %6 = arith.muli %c0_i32, %c1_i32 : i32
    %c0_i32_2 = arith.constant 0 : i32
    %7 = arith.addi %c0_i32_2, %6 : i32
    %c8_i32 = arith.constant 8 : i32
    %8 = arith.muli %7, %c8_i32 : i32
    %9 = tpu.assume_multiple %8, 8 : i32
    %c0_3 = arith.constant 0 : index
    %10 = arith.index_cast %9 : i32 to index
    %c0_4 = arith.constant 0 : index
    %11 = vector.load %arg1[%c0_3, %10, %c0_4] : memref<4x8x128xf32, #tpu.memory_space<vmem>>, vector<1x8x128xf32>
    %12 = vector.shape_cast %11 : vector<1x8x128xf32> to vector<8x128xf32>
    %c1_5 = arith.constant 1 : index
    %13 = arith.index_cast %9 : i32 to index
    %c0_6 = arith.constant 0 : index
    %14 = vector.load %arg1[%c1_5, %13, %c0_6] : memref<4x8x128xf32, #tpu.memory_space<vmem>>, vector<1x8x128xf32>
    %15 = vector.shape_cast %14 : vector<1x8x128xf32> to vector<8x128xf32>
    %c2_7 = arith.constant 2 : index
    %16 = arith.index_cast %9 : i32 to index
    %c0_8 = arith.constant 0 : index
    %17 = vector.load %arg1[%c2_7, %16, %c0_8] : memref<4x8x128xf32, #tpu.memory_space<vmem>>, vector<1x8x128xf32>
    %18 = vector.shape_cast %17 : vector<1x8x128xf32> to vector<8x128xf32>
    %c3_9 = arith.constant 3 : index
    %19 = arith.index_cast %9 : i32 to index
    %c0_10 = arith.constant 0 : index
    %20 = vector.load %arg1[%c3_9, %19, %c0_10] : memref<4x8x128xf32, #tpu.memory_space<vmem>>, vector<1x8x128xf32>
    %21 = vector.shape_cast %20 : vector<1x8x128xf32> to vector<8x128xf32>
    %22 = vector.broadcast %0 : f32 to vector<8x128xf32>
    %23 = arith.mulf %12, %22 : vector<8x128xf32>
    %24 = vector.broadcast %1 : f32 to vector<8x128xf32>
    %25 = arith.mulf %18, %24 : vector<8x128xf32>
    %26 = arith.addf %23, %25 : vector<8x128xf32>
    %27 = vector.broadcast %4 : f32 to vector<8x128xf32>
    %28 = arith.addf %26, %27 : vector<8x128xf32>
    %29 = vector.broadcast %2 : f32 to vector<8x128xf32>
    %30 = arith.mulf %12, %29 : vector<8x128xf32>
    %31 = vector.broadcast %3 : f32 to vector<8x128xf32>
    %32 = arith.mulf %18, %31 : vector<8x128xf32>
    %33 = arith.addf %30, %32 : vector<8x128xf32>
    %34 = vector.broadcast %5 : f32 to vector<8x128xf32>
    %35 = arith.addf %33, %34 : vector<8x128xf32>
    %36 = vector.broadcast %0 : f32 to vector<8x128xf32>
    %37 = arith.mulf %15, %36 : vector<8x128xf32>
    %38 = vector.broadcast %1 : f32 to vector<8x128xf32>
    %39 = arith.mulf %21, %38 : vector<8x128xf32>
    %40 = arith.addf %37, %39 : vector<8x128xf32>
    %41 = vector.broadcast %4 : f32 to vector<8x128xf32>
    %42 = arith.addf %40, %41 : vector<8x128xf32>
    %43 = vector.broadcast %2 : f32 to vector<8x128xf32>
    %44 = arith.mulf %15, %43 : vector<8x128xf32>
    %45 = vector.broadcast %3 : f32 to vector<8x128xf32>
    %46 = arith.mulf %21, %45 : vector<8x128xf32>
    %47 = arith.addf %44, %46 : vector<8x128xf32>
    %48 = vector.broadcast %5 : f32 to vector<8x128xf32>
    %49 = arith.addf %47, %48 : vector<8x128xf32>
    %cst = arith.constant 5.000000e-01 : f32
    %50 = vector.broadcast %cst : f32 to vector<8x128xf32>
    %51 = arith.mulf %50, %28 : vector<8x128xf32>
    %cst_11 = arith.constant 0.707106769 : f32
    %52 = vector.broadcast %cst_11 : f32 to vector<8x128xf32>
    %53 = arith.mulf %28, %52 : vector<8x128xf32>
    %54 = math.absf %53 : vector<8x128xf32>
    %cst_12 = arith.constant 0.327591091 : f32
    %55 = vector.broadcast %cst_12 : f32 to vector<8x128xf32>
    %56 = arith.mulf %55, %54 : vector<8x128xf32>
    %cst_13 = arith.constant 1.000000e+00 : f32
    %57 = vector.broadcast %cst_13 : f32 to vector<8x128xf32>
    %58 = arith.addf %57, %56 : vector<8x128xf32>
    %cst_14 = arith.constant 1.000000e+00 : f32
    %59 = vector.broadcast %cst_14 : f32 to vector<8x128xf32>
    %60 = arith.divf %59, %58 : vector<8x128xf32>
    %cst_15 = arith.constant 1.06140542 : f32
    %61 = vector.broadcast %cst_15 : f32 to vector<8x128xf32>
    %62 = arith.mulf %60, %61 : vector<8x128xf32>
    %cst_16 = arith.constant -1.45315206 : f32
    %63 = vector.broadcast %cst_16 : f32 to vector<8x128xf32>
    %64 = arith.addf %63, %62 : vector<8x128xf32>
    %65 = arith.mulf %60, %64 : vector<8x128xf32>
    %cst_17 = arith.constant 1.42141378 : f32
    %66 = vector.broadcast %cst_17 : f32 to vector<8x128xf32>
    %67 = arith.addf %66, %65 : vector<8x128xf32>
    %68 = arith.mulf %60, %67 : vector<8x128xf32>
    %cst_18 = arith.constant -0.284496725 : f32
    %69 = vector.broadcast %cst_18 : f32 to vector<8x128xf32>
    %70 = arith.addf %69, %68 : vector<8x128xf32>
    %71 = arith.mulf %60, %70 : vector<8x128xf32>
    %cst_19 = arith.constant 0.254829586 : f32
    %72 = vector.broadcast %cst_19 : f32 to vector<8x128xf32>
    %73 = arith.addf %72, %71 : vector<8x128xf32>
    %74 = arith.mulf %60, %73 : vector<8x128xf32>
    %75 = arith.mulf %54, %54 : vector<8x128xf32>
    %cst_20 = arith.constant 0.000000e+00 : f32
    %76 = vector.broadcast %cst_20 : f32 to vector<8x128xf32>
    %77 = arith.subf %76, %75 : vector<8x128xf32>
    %78 = math.exp %77 : vector<8x128xf32>
    %79 = arith.mulf %74, %78 : vector<8x128xf32>
    %cst_21 = arith.constant 1.000000e+00 : f32
    %80 = vector.broadcast %cst_21 : f32 to vector<8x128xf32>
    %81 = arith.subf %80, %79 : vector<8x128xf32>
    %cst_22 = arith.constant 0.000000e+00 : f32
    %82 = vector.broadcast %cst_22 : f32 to vector<8x128xf32>
    %83 = arith.cmpf olt, %53, %82 : vector<8x128xf32>
    %cst_23 = arith.constant 0.000000e+00 : f32
    %84 = vector.broadcast %cst_23 : f32 to vector<8x128xf32>
    %85 = arith.subf %84, %81 : vector<8x128xf32>
    %86 = arith.select %83, %85, %81 : vector<8x128xi1>, vector<8x128xf32>
    %cst_24 = arith.constant 1.000000e+00 : f32
    %87 = vector.broadcast %cst_24 : f32 to vector<8x128xf32>
    %88 = arith.addf %87, %86 : vector<8x128xf32>
    %89 = arith.mulf %51, %88 : vector<8x128xf32>
    %cst_25 = arith.constant 5.000000e-01 : f32
    %90 = vector.broadcast %cst_25 : f32 to vector<8x128xf32>
    %91 = arith.addf %89, %90 : vector<8x128xf32>
    %92 = math.floor %91 : vector<8x128xf32>
    %cst_26 = arith.constant 5.000000e-01 : f32
    %93 = vector.broadcast %cst_26 : f32 to vector<8x128xf32>
    %94 = arith.mulf %93, %35 : vector<8x128xf32>
    %cst_27 = arith.constant 0.707106769 : f32
    %95 = vector.broadcast %cst_27 : f32 to vector<8x128xf32>
    %96 = arith.mulf %35, %95 : vector<8x128xf32>
    %97 = math.absf %96 : vector<8x128xf32>
    %cst_28 = arith.constant 0.327591091 : f32
    %98 = vector.broadcast %cst_28 : f32 to vector<8x128xf32>
    %99 = arith.mulf %98, %97 : vector<8x128xf32>
    %cst_29 = arith.constant 1.000000e+00 : f32
    %100 = vector.broadcast %cst_29 : f32 to vector<8x128xf32>
    %101 = arith.addf %100, %99 : vector<8x128xf32>
    %cst_30 = arith.constant 1.000000e+00 : f32
    %102 = vector.broadcast %cst_30 : f32 to vector<8x128xf32>
    %103 = arith.divf %102, %101 : vector<8x128xf32>
    %cst_31 = arith.constant 1.06140542 : f32
    %104 = vector.broadcast %cst_31 : f32 to vector<8x128xf32>
    %105 = arith.mulf %103, %104 : vector<8x128xf32>
    %cst_32 = arith.constant -1.45315206 : f32
    %106 = vector.broadcast %cst_32 : f32 to vector<8x128xf32>
    %107 = arith.addf %106, %105 : vector<8x128xf32>
    %108 = arith.mulf %103, %107 : vector<8x128xf32>
    %cst_33 = arith.constant 1.42141378 : f32
    %109 = vector.broadcast %cst_33 : f32 to vector<8x128xf32>
    %110 = arith.addf %109, %108 : vector<8x128xf32>
    %111 = arith.mulf %103, %110 : vector<8x128xf32>
    %cst_34 = arith.constant -0.284496725 : f32
    %112 = vector.broadcast %cst_34 : f32 to vector<8x128xf32>
    %113 = arith.addf %112, %111 : vector<8x128xf32>
    %114 = arith.mulf %103, %113 : vector<8x128xf32>
    %cst_35 = arith.constant 0.254829586 : f32
    %115 = vector.broadcast %cst_35 : f32 to vector<8x128xf32>
    %116 = arith.addf %115, %114 : vector<8x128xf32>
    %117 = arith.mulf %103, %116 : vector<8x128xf32>
    %118 = arith.mulf %97, %97 : vector<8x128xf32>
    %cst_36 = arith.constant 0.000000e+00 : f32
    %119 = vector.broadcast %cst_36 : f32 to vector<8x128xf32>
    %120 = arith.subf %119, %118 : vector<8x128xf32>
    %121 = math.exp %120 : vector<8x128xf32>
    %122 = arith.mulf %117, %121 : vector<8x128xf32>
    %cst_37 = arith.constant 1.000000e+00 : f32
    %123 = vector.broadcast %cst_37 : f32 to vector<8x128xf32>
    %124 = arith.subf %123, %122 : vector<8x128xf32>
    %cst_38 = arith.constant 0.000000e+00 : f32
    %125 = vector.broadcast %cst_38 : f32 to vector<8x128xf32>
    %126 = arith.cmpf olt, %96, %125 : vector<8x128xf32>
    %cst_39 = arith.constant 0.000000e+00 : f32
    %127 = vector.broadcast %cst_39 : f32 to vector<8x128xf32>
    %128 = arith.subf %127, %124 : vector<8x128xf32>
    %129 = arith.select %126, %128, %124 : vector<8x128xi1>, vector<8x128xf32>
    %cst_40 = arith.constant 1.000000e+00 : f32
    %130 = vector.broadcast %cst_40 : f32 to vector<8x128xf32>
    %131 = arith.addf %130, %129 : vector<8x128xf32>
    %132 = arith.mulf %94, %131 : vector<8x128xf32>
    %cst_41 = arith.constant 5.000000e-01 : f32
    %133 = vector.broadcast %cst_41 : f32 to vector<8x128xf32>
    %134 = arith.addf %132, %133 : vector<8x128xf32>
    %135 = math.floor %134 : vector<8x128xf32>
    %cst_42 = arith.constant 5.000000e-01 : f32
    %136 = vector.broadcast %cst_42 : f32 to vector<8x128xf32>
    %137 = arith.mulf %136, %42 : vector<8x128xf32>
    %cst_43 = arith.constant 0.707106769 : f32
    %138 = vector.broadcast %cst_43 : f32 to vector<8x128xf32>
    %139 = arith.mulf %42, %138 : vector<8x128xf32>
    %140 = math.absf %139 : vector<8x128xf32>
    %cst_44 = arith.constant 0.327591091 : f32
    %141 = vector.broadcast %cst_44 : f32 to vector<8x128xf32>
    %142 = arith.mulf %141, %140 : vector<8x128xf32>
    %cst_45 = arith.constant 1.000000e+00 : f32
    %143 = vector.broadcast %cst_45 : f32 to vector<8x128xf32>
    %144 = arith.addf %143, %142 : vector<8x128xf32>
    %cst_46 = arith.constant 1.000000e+00 : f32
    %145 = vector.broadcast %cst_46 : f32 to vector<8x128xf32>
    %146 = arith.divf %145, %144 : vector<8x128xf32>
    %cst_47 = arith.constant 1.06140542 : f32
    %147 = vector.broadcast %cst_47 : f32 to vector<8x128xf32>
    %148 = arith.mulf %146, %147 : vector<8x128xf32>
    %cst_48 = arith.constant -1.45315206 : f32
    %149 = vector.broadcast %cst_48 : f32 to vector<8x128xf32>
    %150 = arith.addf %149, %148 : vector<8x128xf32>
    %151 = arith.mulf %146, %150 : vector<8x128xf32>
    %cst_49 = arith.constant 1.42141378 : f32
    %152 = vector.broadcast %cst_49 : f32 to vector<8x128xf32>
    %153 = arith.addf %152, %151 : vector<8x128xf32>
    %154 = arith.mulf %146, %153 : vector<8x128xf32>
    %cst_50 = arith.constant -0.284496725 : f32
    %155 = vector.broadcast %cst_50 : f32 to vector<8x128xf32>
    %156 = arith.addf %155, %154 : vector<8x128xf32>
    %157 = arith.mulf %146, %156 : vector<8x128xf32>
    %cst_51 = arith.constant 0.254829586 : f32
    %158 = vector.broadcast %cst_51 : f32 to vector<8x128xf32>
    %159 = arith.addf %158, %157 : vector<8x128xf32>
    %160 = arith.mulf %146, %159 : vector<8x128xf32>
    %161 = arith.mulf %140, %140 : vector<8x128xf32>
    %cst_52 = arith.constant 0.000000e+00 : f32
    %162 = vector.broadcast %cst_52 : f32 to vector<8x128xf32>
    %163 = arith.subf %162, %161 : vector<8x128xf32>
    %164 = math.exp %163 : vector<8x128xf32>
    %165 = arith.mulf %160, %164 : vector<8x128xf32>
    %cst_53 = arith.constant 1.000000e+00 : f32
    %166 = vector.broadcast %cst_53 : f32 to vector<8x128xf32>
    %167 = arith.subf %166, %165 : vector<8x128xf32>
    %cst_54 = arith.constant 0.000000e+00 : f32
    %168 = vector.broadcast %cst_54 : f32 to vector<8x128xf32>
    %169 = arith.cmpf olt, %139, %168 : vector<8x128xf32>
    %cst_55 = arith.constant 0.000000e+00 : f32
    %170 = vector.broadcast %cst_55 : f32 to vector<8x128xf32>
    %171 = arith.subf %170, %167 : vector<8x128xf32>
    %172 = arith.select %169, %171, %167 : vector<8x128xi1>, vector<8x128xf32>
    %cst_56 = arith.constant 1.000000e+00 : f32
    %173 = vector.broadcast %cst_56 : f32 to vector<8x128xf32>
    %174 = arith.addf %173, %172 : vector<8x128xf32>
    %175 = arith.mulf %137, %174 : vector<8x128xf32>
    %cst_57 = arith.constant 5.000000e-01 : f32
    %176 = vector.broadcast %cst_57 : f32 to vector<8x128xf32>
    %177 = arith.addf %175, %176 : vector<8x128xf32>
    %178 = math.floor %177 : vector<8x128xf32>
    %cst_58 = arith.constant 5.000000e-01 : f32
    %179 = vector.broadcast %cst_58 : f32 to vector<8x128xf32>
    %180 = arith.mulf %179, %49 : vector<8x128xf32>
    %cst_59 = arith.constant 0.707106769 : f32
    %181 = vector.broadcast %cst_59 : f32 to vector<8x128xf32>
    %182 = arith.mulf %49, %181 : vector<8x128xf32>
    %183 = math.absf %182 : vector<8x128xf32>
    %cst_60 = arith.constant 0.327591091 : f32
    %184 = vector.broadcast %cst_60 : f32 to vector<8x128xf32>
    %185 = arith.mulf %184, %183 : vector<8x128xf32>
    %cst_61 = arith.constant 1.000000e+00 : f32
    %186 = vector.broadcast %cst_61 : f32 to vector<8x128xf32>
    %187 = arith.addf %186, %185 : vector<8x128xf32>
    %cst_62 = arith.constant 1.000000e+00 : f32
    %188 = vector.broadcast %cst_62 : f32 to vector<8x128xf32>
    %189 = arith.divf %188, %187 : vector<8x128xf32>
    %cst_63 = arith.constant 1.06140542 : f32
    %190 = vector.broadcast %cst_63 : f32 to vector<8x128xf32>
    %191 = arith.mulf %189, %190 : vector<8x128xf32>
    %cst_64 = arith.constant -1.45315206 : f32
    %192 = vector.broadcast %cst_64 : f32 to vector<8x128xf32>
    %193 = arith.addf %192, %191 : vector<8x128xf32>
    %194 = arith.mulf %189, %193 : vector<8x128xf32>
    %cst_65 = arith.constant 1.42141378 : f32
    %195 = vector.broadcast %cst_65 : f32 to vector<8x128xf32>
    %196 = arith.addf %195, %194 : vector<8x128xf32>
    %197 = arith.mulf %189, %196 : vector<8x128xf32>
    %cst_66 = arith.constant -0.284496725 : f32
    %198 = vector.broadcast %cst_66 : f32 to vector<8x128xf32>
    %199 = arith.addf %198, %197 : vector<8x128xf32>
    %200 = arith.mulf %189, %199 : vector<8x128xf32>
    %cst_67 = arith.constant 0.254829586 : f32
    %201 = vector.broadcast %cst_67 : f32 to vector<8x128xf32>
    %202 = arith.addf %201, %200 : vector<8x128xf32>
    %203 = arith.mulf %189, %202 : vector<8x128xf32>
    %204 = arith.mulf %183, %183 : vector<8x128xf32>
    %cst_68 = arith.constant 0.000000e+00 : f32
    %205 = vector.broadcast %cst_68 : f32 to vector<8x128xf32>
    %206 = arith.subf %205, %204 : vector<8x128xf32>
    %207 = math.exp %206 : vector<8x128xf32>
    %208 = arith.mulf %203, %207 : vector<8x128xf32>
    %cst_69 = arith.constant 1.000000e+00 : f32
    %209 = vector.broadcast %cst_69 : f32 to vector<8x128xf32>
    %210 = arith.subf %209, %208 : vector<8x128xf32>
    %cst_70 = arith.constant 0.000000e+00 : f32
    %211 = vector.broadcast %cst_70 : f32 to vector<8x128xf32>
    %212 = arith.cmpf olt, %182, %211 : vector<8x128xf32>
    %cst_71 = arith.constant 0.000000e+00 : f32
    %213 = vector.broadcast %cst_71 : f32 to vector<8x128xf32>
    %214 = arith.subf %213, %210 : vector<8x128xf32>
    %215 = arith.select %212, %214, %210 : vector<8x128xi1>, vector<8x128xf32>
    %cst_72 = arith.constant 1.000000e+00 : f32
    %216 = vector.broadcast %cst_72 : f32 to vector<8x128xf32>
    %217 = arith.addf %216, %215 : vector<8x128xf32>
    %218 = arith.mulf %180, %217 : vector<8x128xf32>
    %cst_73 = arith.constant 5.000000e-01 : f32
    %219 = vector.broadcast %cst_73 : f32 to vector<8x128xf32>
    %220 = arith.addf %218, %219 : vector<8x128xf32>
    %221 = math.floor %220 : vector<8x128xf32>
    %222 = arith.subf %92, %135 : vector<8x128xf32>
    %223 = math.absf %222 : vector<8x128xf32>
    %cst_74 = arith.constant 0.000000e+00 : f32
    %224 = vector.broadcast %cst_74 : f32 to vector<8x128xf32>
    %225 = arith.subf %224, %223 : vector<8x128xf32>
    %226 = math.exp %225 : vector<8x128xf32>
    %cst_75 = arith.constant 1.000000e+00 : f32
    %227 = vector.broadcast %cst_75 : f32 to vector<8x128xf32>
    %228 = arith.addf %227, %226 : vector<8x128xf32>
    %cst_76 = arith.constant 1.000000e+00 : f32
    %229 = vector.broadcast %cst_76 : f32 to vector<8x128xf32>
    %230 = arith.divf %229, %228 : vector<8x128xf32>
    %231 = arith.subf %178, %221 : vector<8x128xf32>
    %232 = math.absf %231 : vector<8x128xf32>
    %cst_77 = arith.constant 0.000000e+00 : f32
    %233 = vector.broadcast %cst_77 : f32 to vector<8x128xf32>
    %234 = arith.subf %233, %232 : vector<8x128xf32>
    %235 = math.exp %234 : vector<8x128xf32>
    %cst_78 = arith.constant 1.000000e+00 : f32
    %236 = vector.broadcast %cst_78 : f32 to vector<8x128xf32>
    %237 = arith.addf %236, %235 : vector<8x128xf32>
    %cst_79 = arith.constant 1.000000e+00 : f32
    %238 = vector.broadcast %cst_79 : f32 to vector<8x128xf32>
    %239 = arith.divf %238, %237 : vector<8x128xf32>
    %240 = arith.mulf %12, %230 : vector<8x128xf32>
    %241 = arith.mulf %18, %239 : vector<8x128xf32>
    %242 = arith.mulf %15, %230 : vector<8x128xf32>
    %243 = arith.mulf %21, %239 : vector<8x128xf32>
    %cst_80 = arith.constant 0.000000e+00 : f32
    %244 = vector.broadcast %cst_80 : f32 to vector<8x128xf32>
    %245 = arith.cmpf olt, %240, %244 : vector<8x128xf32>
    %cst_81 = arith.constant 1.000000e+00 : f32
    %246 = vector.broadcast %cst_81 : f32 to vector<8x128xf32>
    %247 = arith.cmpf oge, %240, %246 : vector<8x128xf32>
    %248 = arith.ori %245, %247 : vector<8x128xi1>
    %cst_82 = arith.constant 1.000000e+00 : f32
    %cst_83 = arith.constant 0.000000e+00 : f32
    %249 = vector.broadcast %cst_82 : f32 to vector<8x128xf32>
    %250 = vector.broadcast %cst_83 : f32 to vector<8x128xf32>
    %251 = arith.select %248, %249, %250 : vector<8x128xi1>, vector<8x128xf32>
    %cst_84 = arith.constant 0.000000e+00 : f32
    %252 = vector.broadcast %cst_84 : f32 to vector<8x128xf32>
    %253 = arith.cmpf olt, %241, %252 : vector<8x128xf32>
    %cst_85 = arith.constant 1.000000e+00 : f32
    %254 = vector.broadcast %cst_85 : f32 to vector<8x128xf32>
    %255 = arith.cmpf oge, %241, %254 : vector<8x128xf32>
    %256 = arith.ori %253, %255 : vector<8x128xi1>
    %cst_86 = arith.constant 1.000000e+00 : f32
    %cst_87 = arith.constant 0.000000e+00 : f32
    %257 = vector.broadcast %cst_86 : f32 to vector<8x128xf32>
    %258 = vector.broadcast %cst_87 : f32 to vector<8x128xf32>
    %259 = arith.select %256, %257, %258 : vector<8x128xi1>, vector<8x128xf32>
    %cst_88 = arith.constant 0.000000e+00 : f32
    %260 = vector.broadcast %cst_88 : f32 to vector<8x128xf32>
    %261 = arith.cmpf olt, %242, %260 : vector<8x128xf32>
    %cst_89 = arith.constant 1.000000e+00 : f32
    %262 = vector.broadcast %cst_89 : f32 to vector<8x128xf32>
    %263 = arith.cmpf oge, %242, %262 : vector<8x128xf32>
    %264 = arith.ori %261, %263 : vector<8x128xi1>
    %cst_90 = arith.constant 1.000000e+00 : f32
    %cst_91 = arith.constant 0.000000e+00 : f32
    %265 = vector.broadcast %cst_90 : f32 to vector<8x128xf32>
    %266 = vector.broadcast %cst_91 : f32 to vector<8x128xf32>
    %267 = arith.select %264, %265, %266 : vector<8x128xi1>, vector<8x128xf32>
    %cst_92 = arith.constant 0.000000e+00 : f32
    %268 = vector.broadcast %cst_92 : f32 to vector<8x128xf32>
    %269 = arith.cmpf olt, %243, %268 : vector<8x128xf32>
    %cst_93 = arith.constant 1.000000e+00 : f32
    %270 = vector.broadcast %cst_93 : f32 to vector<8x128xf32>
    %271 = arith.cmpf oge, %243, %270 : vector<8x128xf32>
    %272 = arith.ori %269, %271 : vector<8x128xi1>
    %cst_94 = arith.constant 1.000000e+00 : f32
    %cst_95 = arith.constant 0.000000e+00 : f32
    %273 = vector.broadcast %cst_94 : f32 to vector<8x128xf32>
    %274 = vector.broadcast %cst_95 : f32 to vector<8x128xf32>
    %275 = arith.select %272, %273, %274 : vector<8x128xi1>, vector<8x128xf32>
    %276 = arith.subf %251, %259 : vector<8x128xf32>
    %cst_96 = arith.constant 0.380797088 : f32
    %277 = vector.broadcast %cst_96 : f32 to vector<8x128xf32>
    %278 = arith.mulf %276, %277 : vector<8x128xf32>
    %cst_97 = arith.constant 5.000000e-01 : f32
    %279 = vector.broadcast %cst_97 : f32 to vector<8x128xf32>
    %280 = arith.addf %279, %278 : vector<8x128xf32>
    %cst_98 = arith.constant 1.000000e+00 : f32
    %281 = vector.broadcast %cst_98 : f32 to vector<8x128xf32>
    %282 = arith.subf %281, %280 : vector<8x128xf32>
    %283 = arith.subf %267, %275 : vector<8x128xf32>
    %cst_99 = arith.constant 0.380797088 : f32
    %284 = vector.broadcast %cst_99 : f32 to vector<8x128xf32>
    %285 = arith.mulf %283, %284 : vector<8x128xf32>
    %cst_100 = arith.constant 5.000000e-01 : f32
    %286 = vector.broadcast %cst_100 : f32 to vector<8x128xf32>
    %287 = arith.addf %286, %285 : vector<8x128xf32>
    %cst_101 = arith.constant 1.000000e+00 : f32
    %288 = vector.broadcast %cst_101 : f32 to vector<8x128xf32>
    %289 = arith.subf %288, %287 : vector<8x128xf32>
    %290 = arith.mulf %251, %280 : vector<8x128xf32>
    %291 = arith.mulf %259, %282 : vector<8x128xf32>
    %292 = arith.addf %290, %291 : vector<8x128xf32>
    %c0_102 = arith.constant 0 : index
    %293 = arith.index_cast %9 : i32 to index
    %c0_103 = arith.constant 0 : index
    %294 = vector.load %arg4[%c0_102, %293, %c0_103] : memref<4x8x128xf32, #tpu.memory_space<vmem>>, vector<1x8x128xf32>
    %295 = vector.shape_cast %294 : vector<1x8x128xf32> to vector<8x128xf32>
    %296 = vector.shape_cast %292 : vector<8x128xf32> to vector<1x8x128xf32>
    tpu.vector_store %arg4[%c0_102, %293, %c0_103], %296 {strides = array<i32>} : memref<4x8x128xf32, #tpu.memory_space<vmem>>, vector<1x8x128xf32>,
    %297 = arith.mulf %251, %287 : vector<8x128xf32>
    %298 = arith.mulf %259, %289 : vector<8x128xf32>
    %299 = arith.addf %297, %298 : vector<8x128xf32>
    %c1_104 = arith.constant 1 : index
    %300 = arith.index_cast %9 : i32 to index
    %c0_105 = arith.constant 0 : index
    %301 = vector.load %arg4[%c1_104, %300, %c0_105] : memref<4x8x128xf32, #tpu.memory_space<vmem>>, vector<1x8x128xf32>
    %302 = vector.shape_cast %301 : vector<1x8x128xf32> to vector<8x128xf32>
    %303 = vector.shape_cast %299 : vector<8x128xf32> to vector<1x8x128xf32>
    tpu.vector_store %arg4[%c1_104, %300, %c0_105], %303 {strides = array<i32>} : memref<4x8x128xf32, #tpu.memory_space<vmem>>, vector<1x8x128xf32>,
    %304 = arith.mulf %267, %280 : vector<8x128xf32>
    %305 = arith.mulf %275, %282 : vector<8x128xf32>
    %306 = arith.addf %304, %305 : vector<8x128xf32>
    %c2_106 = arith.constant 2 : index
    %307 = arith.index_cast %9 : i32 to index
    %c0_107 = arith.constant 0 : index
    %308 = vector.load %arg4[%c2_106, %307, %c0_107] : memref<4x8x128xf32, #tpu.memory_space<vmem>>, vector<1x8x128xf32>
    %309 = vector.shape_cast %308 : vector<1x8x128xf32> to vector<8x128xf32>
    %310 = vector.shape_cast %306 : vector<8x128xf32> to vector<1x8x128xf32>
    tpu.vector_store %arg4[%c2_106, %307, %c0_107], %310 {strides = array<i32>} : memref<4x8x128xf32, #tpu.memory_space<vmem>>, vector<1x8x128xf32>,
    %311 = arith.mulf %267, %287 : vector<8x128xf32>
    %312 = arith.mulf %275, %289 : vector<8x128xf32>
    %313 = arith.addf %311, %312 : vector<8x128xf32>
    %c3_108 = arith.constant 3 : index
    %314 = arith.index_cast %9 : i32 to index
    %c0_109 = arith.constant 0 : index
    %315 = vector.load %arg4[%c3_108, %314, %c0_109] : memref<4x8x128xf32, #tpu.memory_space<vmem>>, vector<1x8x128xf32>
    %316 = vector.shape_cast %315 : vector<1x8x128xf32> to vector<8x128xf32>
    %317 = vector.shape_cast %313 : vector<8x128xf32> to vector<1x8x128xf32>
    tpu.vector_store %arg4[%c3_108, %314, %c0_109], %317 {strides = array<i32>} : memref<4x8x128xf32, #tpu.memory_space<vmem>>, vector<1x8x128xf32>,
    %c1_i32_110 = arith.constant 1 : i32
    return
  }
  func.func @transform_0(%arg0: i32) -> (i32, i32, i32) {
    %c0_i32 = arith.constant 0 : i32
    %c0_i32_0 = arith.constant 0 : i32
    %c0_i32_1 = arith.constant 0 : i32
    return %c0_i32, %arg0, %c0_i32_0 : i32, i32, i32
  }
  func.func @transform_1(%arg0: i32) -> i32 {
    %c0_i32 = arith.constant 0 : i32
    %c0_i32_0 = arith.constant 0 : i32
    return %c0_i32 : i32
  }
  func.func @transform_2(%arg0: i32) -> i32 {
    %c0_i32 = arith.constant 0 : i32
    %c0_i32_0 = arith.constant 0 : i32
    return %c0_i32 : i32
  }
  func.func @transform_3(%arg0: i32) -> (i32, i32, i32) {
    %c0_i32 = arith.constant 0 : i32
    %c0_i32_0 = arith.constant 0 : i32
    %c0_i32_1 = arith.constant 0 : i32
    return %c0_i32, %arg0, %c0_i32_0 : i32, i32, i32
  }
}

</mosaic_0001>

<llo_original>
// kernel: tpu_custom_call.1
$region0: #{tpu_custom_call.1}
  #allocation0 [shape = 'u32[]', space=smem, size = 0x4, offset = 0x4, fixed_abs, tag = 'smem constant byte address 0x4 - core index']
  #allocation1 [shape = 'u32[144,128]{1,0:T(1,128)}', space=vmem, size = 0x12000, scoped, tag = 'internal scratch']
  %s0 = inlined_call_operand.hbm [shape: f32[4,8,128], index: 0, kind: input, shape index: {}]
  %s1 = inlined_call_operand.vmem [shape: f32[4], index: 1, kind: input, shape index: {}]
  %s2 = inlined_call_operand.vmem [shape: f32[2], index: 2, kind: input, shape index: {}]
  %s3 = inlined_call_operand.hbm [shape: f32[4,8,128], index: 3, kind: output, shape index: {}]
  %s4 = sld [smem:[#allocation0]]
  $region34: #{tpu_custom_call.1} parent=0
    _
  %s6 = ssub.s32 1, %s4
  %s7 = scalar_select 0, %s6, %s4
  $region1: #{tpu_custom_call.1} parent=0
    #allocation2 [shape = 'u8[16384]{0}', space=vmem, size = 0x4000, scoped, tag = 'input window, operand 0, single buffered']
    #allocation3 [shape = 's32[1]{0}', space=sflag, size = 0x4, scoped, tag = 'scoped memory for tpu_custom_call.1']
    #allocation4 [shape = 's32[1]{0}', space=sflag, size = 0x4, scoped, tag = 'scoped memory for tpu_custom_call.1']
    #allocation5 [shape = 's32[1]{0}', space=sflag, size = 0x4, scoped, tag = 'scoped memory for tpu_custom_call.1']
    #allocation6 [shape = 'u8[512]{0}', space=smem, size = 0x200, scoped, tag = 'input window, operand 1, single buffered']
    #allocation7 [shape = 'u8[512]{0}', space=smem, size = 0x200, scoped, tag = 'input window, operand 2, single buffered']
    #allocation8 [shape = 's32[1]{0}', space=sflag, size = 0x4, scoped, tag = 'scoped memory for tpu_custom_call.1']
    #allocation9 [shape = 'u8[16384]{0}', space=vmem, size = 0x4000, scoped, tag = 'output window, operand 0, single buffered']
    %8 = vsyncpa [#allocation3], 0
    %9 = vsyncpa [#allocation5], 0
    %10 = vsyncpa [#allocation8], 0
    %11 = vsyncpa [#allocation4], 0
    // Predicated region
    $region2: #{tpu_custom_call.1} parent=1 // pred_check
      _
    $region3: #{tpu_custom_call.1} parent=1 // pred_check_branch
      %13 = sbr.rel (0) target = $region5
    $region4: #{tpu_custom_call.1} parent=1 // pred_region
      %s15 = ssub.s32 512, 512
      %16 = vsyncadd [#allocation3], %s15
      %s17 = sshll.u32 [#allocation2], 4
      %s18 = int_to_ptr.vmem [resolvable:$true] %s17
      %23 = dma.hbm_to_vmem [thread:$0]  %s0, 512, %s18, [#allocation3], 128, 128, 8
    $region5: #{tpu_custom_call.1} parent=1 // pred_fallthru
      _
    // Predicated region
    $region6: #{tpu_custom_call.1} parent=1 // pred_check
      _
    $region7: #{tpu_custom_call.1} parent=1 // pred_check_branch
      %25 = sbr.rel (0) target = $region9
    $region8: #{tpu_custom_call.1} parent=1 // pred_region
      %s27 = ssub.s32 16, 16
      %28 = vsyncadd [#allocation5], %s27
      %s30 = sshll.u32 %s1, 4
      %s31 = int_to_ptr.vmem [resolvable:$true] %s30
      %33 = dma.vmem_to_smem %s31, 16, [#allocation6], [#allocation5]
    $region9: #{tpu_custom_call.1} parent=1 // pred_fallthru
      _
    // Predicated region
    $region10: #{tpu_custom_call.1} parent=1 // pred_check
      _
    $region11: #{tpu_custom_call.1} parent=1 // pred_check_branch
      %35 = sbr.rel (0) target = $region13
    $region12: #{tpu_custom_call.1} parent=1 // pred_region
      %s37 = ssub.s32 16, 16
      %38 = vsyncadd [#allocation8], %s37
      %s40 = sshll.u32 %s2, 4
      %s41 = int_to_ptr.vmem [resolvable:$true] %s40
      %43 = dma.vmem_to_smem %s41, 16, [#allocation7], [#allocation8]
    $region13: #{tpu_custom_call.1} parent=1 // pred_fallthru
      _
    // Predicated region
    $region14: #{tpu_custom_call.1} parent=1 // pred_check
      _
    $region15: #{tpu_custom_call.1} parent=1 // pred_check_branch
      %45 = sbr.rel (0) target = $region17
    $region16: #{tpu_custom_call.1} parent=1 // pred_region
      %46 = dma.done [#allocation3], 512
    $region17: #{tpu_custom_call.1} parent=1 // pred_fallthru
      _
    // Predicated region
    $region18: #{tpu_custom_call.1} parent=1 // pred_check
      _
    $region19: #{tpu_custom_call.1} parent=1 // pred_check_branch
      %48 = sbr.rel (0) target = $region21
    $region20: #{tpu_custom_call.1} parent=1 // pred_region
      %49 = dma.done [#allocation5], 16
    $region21: #{tpu_custom_call.1} parent=1 // pred_fallthru
      _
    // Predicated region
    $region22: #{tpu_custom_call.1} parent=1 // pred_check
      _
    $region23: #{tpu_custom_call.1} parent=1 // pred_check_branch
      %51 = sbr.rel (0) target = $region25
    $region24: #{tpu_custom_call.1} parent=1 // pred_region
      %52 = dma.done [#allocation8], 16
    $region25: #{tpu_custom_call.1} parent=1 // pred_fallthru
      _
    %53 = sfence
    %s54 = sld [smem:[#allocation6]]
    %s55 = sld [smem:[#allocation6 + $0x1]]
    %s56 = sld [smem:[#allocation6 + $0x2]]
    %s57 = sld [smem:[#allocation6 + $0x3]]
    %s58 = sld [smem:[#allocation7]]
    %s59 = sld [smem:[#allocation7 + $0x1]]
    %v60 = vld [vmem:[#allocation2] sm:$0xff]
    %s61 = sadd.s32 0, 8
    %s62 = scalar_lea.vmem [#allocation2], %s61
    %v63 = vld [vmem:[%s62] sm:$0xff]
    %s64 = sadd.s32 0, 16
    %s65 = scalar_lea.vmem [#allocation2], %s64
    %v66 = vld [vmem:[%s65] sm:$0xff]
    %s67 = sadd.s32 0, 24
    %s68 = scalar_lea.vmem [#allocation2], %s67
    %v69 = vld [vmem:[%s68] sm:$0xff]
    %v70 = vstv %s54
    %v71 = vmul.f32 %v60, %v70
    %v72 = vstv %s55
    %v73 = vmul.f32 %v66, %v72
    %v74 = vadd.f32 %v71, %v73
    %v75 = vstv %s58
    %v76 = vadd.f32 %v74, %v75
    %v77 = vstv %s56
    %v78 = vmul.f32 %v60, %v77
    %v79 = vstv %s57
    %v80 = vmul.f32 %v66, %v79
    %v81 = vadd.f32 %v78, %v80
    %v82 = vstv %s59
    %v83 = vadd.f32 %v81, %v82
    %v84 = vmul.f32 %v63, %v70
    %v85 = vmul.f32 %v69, %v72
    %v86 = vadd.f32 %v84, %v85
    %v87 = vadd.f32 %v86, %v75
    %v88 = vmul.f32 %v63, %v77
    %v89 = vmul.f32 %v69, %v79
    %v90 = vadd.f32 %v88, %v89
    %v91 = vadd.f32 %v90, %v82
    %v92 = vmul.f32 %v76, 0.5
    %v93 = vmul.f32 %v76, 0.70710677
    %v94 = vand.u32 2147483647, %v93
    %v95 = vmul.f32 %v94, 0.3275911
    %v96 = vadd.f32 %v95, 1.0
    %v97 = vrcp.pop %v96
    %v98 = vmul.f32 1.0, %v97
    %v99 = vmul.f32 %v98, 1.0614054
    %v100 = vadd.f32 %v99, -1.4531521
    %v101 = vmul.f32 %v98, %v100
    %v102 = vadd.f32 %v101, 1.4214138
    %v103 = vmul.f32 %v98, %v102
    %v104 = vadd.f32 %v103, -0.28449672
    %v105 = vmul.f32 %v98, %v104
    %v106 = vadd.f32 %v105, 0.2548296
    %v107 = vmul.f32 %v98, %v106
    %v108 = vmul.f32 %v94, %v94
    %v109 = vsub.f32 0.0, %v108
    %v110 = vmul.f32 %v109, 1.442695
    %v111 = vpow.pop %v110
    %v112 = vmul.f32 %v107, %v111
    %v113 = vsub.f32 1.0, %v112
    %vm114 = vcmp.lt.f32.partialorder %v93, 0.0
    %v115 = vsub.f32 0.0, %v113
    %v116 = vsel %vm114, %v115, %v113
    %v117 = vadd.f32 %v116, 1.0
    %v118 = vmul.f32 %v92, %v117
    %v119 = vadd.f32 %v118, 0.5
    %v120 = vfloor.f32 %v119
    %v121 = vmul.f32 %v83, 0.5
    %v122 = vmul.f32 %v83, 0.70710677
    %v123 = vand.u32 2147483647, %v122
    %v124 = vmul.f32 %v123, 0.3275911
    %v125 = vadd.f32 %v124, 1.0
    %v126 = vrcp.pop %v125
    %v127 = vmul.f32 1.0, %v126
    %v128 = vmul.f32 %v127, 1.0614054
    %v129 = vadd.f32 %v128, -1.4531521
    %v130 = vmul.f32 %v127, %v129
    %v131 = vadd.f32 %v130, 1.4214138
    %v132 = vmul.f32 %v127, %v131
    %v133 = vadd.f32 %v132, -0.28449672
    %v134 = vmul.f32 %v127, %v133
    %v135 = vadd.f32 %v134, 0.2548296
    %v136 = vmul.f32 %v127, %v135
    %v137 = vmul.f32 %v123, %v123
    %v138 = vsub.f32 0.0, %v137
    %v139 = vmul.f32 %v138, 1.442695
    %v140 = vpow.pop %v139
    %v141 = vmul.f32 %v136, %v140
    %v142 = vsub.f32 1.0, %v141
    %vm143 = vcmp.lt.f32.partialorder %v122, 0.0
    %v144 = vsub.f32 0.0, %v142
    %v145 = vsel %vm143, %v144, %v142
    %v146 = vadd.f32 %v145, 1.0
    %v147 = vmul.f32 %v121, %v146
    %v148 = vadd.f32 %v147, 0.5
    %v149 = vfloor.f32 %v148
    %v150 = vmul.f32 %v87, 0.5
    %v151 = vmul.f32 %v87, 0.70710677
    %v152 = vand.u32 2147483647, %v151
    %v153 = vmul.f32 %v152, 0.3275911
    %v154 = vadd.f32 %v153, 1.0
    %v155 = vrcp.pop %v154
    %v156 = vmul.f32 1.0, %v155
    %v157 = vmul.f32 %v156, 1.0614054
    %v158 = vadd.f32 %v157, -1.4531521
    %v159 = vmul.f32 %v156, %v158
    %v160 = vadd.f32 %v159, 1.4214138
    %v161 = vmul.f32 %v156, %v160
    %v162 = vadd.f32 %v161, -0.28449672
    %v163 = vmul.f32 %v156, %v162
    %v164 = vadd.f32 %v163, 0.2548296
    %v165 = vmul.f32 %v156, %v164
    %v166 = vmul.f32 %v152, %v152
    %v167 = vsub.f32 0.0, %v166
    %v168 = vmul.f32 %v167, 1.442695
    %v169 = vpow.pop %v168
    %v170 = vmul.f32 %v165, %v169
    %v171 = vsub.f32 1.0, %v170
    %vm172 = vcmp.lt.f32.partialorder %v151, 0.0
    %v173 = vsub.f32 0.0, %v171
    %v174 = vsel %vm172, %v173, %v171
    %v175 = vadd.f32 %v174, 1.0
    %v176 = vmul.f32 %v150, %v175
    %v177 = vadd.f32 %v176, 0.5
    %v178 = vfloor.f32 %v177
    %v179 = vmul.f32 %v91, 0.5
    %v180 = vmul.f32 %v91, 0.70710677
    %v181 = vand.u32 2147483647, %v180
    %v182 = vmul.f32 %v181, 0.3275911
    %v183 = vadd.f32 %v182, 1.0
    %v184 = vrcp.pop %v183
    %v185 = vmul.f32 1.0, %v184
    %v186 = vmul.f32 %v185, 1.0614054
    %v187 = vadd.f32 %v186, -1.4531521
    %v188 = vmul.f32 %v185, %v187
    %v189 = vadd.f32 %v188, 1.4214138
    %v190 = vmul.f32 %v185, %v189
    %v191 = vadd.f32 %v190, -0.28449672
    %v192 = vmul.f32 %v185, %v191
    %v193 = vadd.f32 %v192, 0.2548296
    %v194 = vmul.f32 %v185, %v193
    %v195 = vmul.f32 %v181, %v181
    %v196 = vsub.f32 0.0, %v195
    %v197 = vmul.f32 %v196, 1.442695
    %v198 = vpow.pop %v197
    %v199 = vmul.f32 %v194, %v198
    %v200 = vsub.f32 1.0, %v199
    %vm201 = vcmp.lt.f32.partialorder %v180, 0.0
    %v202 = vsub.f32 0.0, %v200
    %v203 = vsel %vm201, %v202, %v200
    %v204 = vadd.f32 %v203, 1.0
    %v205 = vmul.f32 %v179, %v204
    %v206 = vadd.f32 %v205, 0.5
    %v207 = vfloor.f32 %v206
    %v208 = vsub.f32 %v120, %v149
    %v209 = vand.u32 2147483647, %v208
    %v210 = vsub.f32 0.0, %v209
    %v211 = vmul.f32 %v210, 1.442695
    %v212 = vpow.pop %v211
    %v213 = vadd.f32 %v212, 1.0
    %v214 = vrcp.pop %v213
    %v215 = vmul.f32 1.0, %v214
    %v216 = vsub.f32 %v178, %v207
    %v217 = vand.u32 2147483647, %v216
    %v218 = vsub.f32 0.0, %v217
    %v219 = vmul.f32 %v218, 1.442695
    %v220 = vpow.pop %v219
    %v221 = vadd.f32 %v220, 1.0
    %v222 = vrcp.pop %v221
    %v223 = vmul.f32 1.0, %v222
    %v224 = vmul.f32 %v60, %v215
    %v225 = vmul.f32 %v66, %v223
    %v226 = vmul.f32 %v63, %v215
    %v227 = vmul.f32 %v69, %v223
    %vm228 = vcmp.lt.f32.partialorder %v224, 0.0
    %vm229 = vcmp.ge.f32.partialorder %v224, 1.0
    %vm230 = vmor %vm228, %vm229
    %v231 = vsel %vm230, 1.0, 0.0
    %vm232 = vcmp.lt.f32.partialorder %v225, 0.0
    %vm233 = vcmp.ge.f32.partialorder %v225, 1.0
    %vm234 = vmor %vm232, %vm233
    %v235 = vsel %vm234, 1.0, 0.0
    %vm236 = vcmp.lt.f32.partialorder %v226, 0.0
    %vm237 = vcmp.ge.f32.partialorder %v226, 1.0
    %vm238 = vmor %vm236, %vm237
    %v239 = vsel %vm238, 1.0, 0.0
    %vm240 = vcmp.lt.f32.partialorder %v227, 0.0
    %vm241 = vcmp.ge.f32.partialorder %v227, 1.0
    %vm242 = vmor %vm240, %vm241
    %v243 = vsel %vm242, 1.0, 0.0
    %v244 = vsub.f32 %v231, %v235
    %v245 = vmul.f32 %v244, 0.3807971
    %v246 = vadd.f32 %v245, 0.5
    %v247 = vsub.f32 1.0, %v246
    %v248 = vsub.f32 %v239, %v243
    %v249 = vmul.f32 %v248, 0.3807971
    %v250 = vadd.f32 %v249, 0.5
    %v251 = vsub.f32 1.0, %v250
    %v252 = vmul.f32 %v231, %v246
    %v253 = vmul.f32 %v235, %v247
    %v254 = vadd.f32 %v252, %v253
    %255 = vst [vmem:[#allocation9] sm:$0xff] %v254
    %v256 = vmul.f32 %v231, %v250
    %v257 = vmul.f32 %v235, %v251
    %v258 = vadd.f32 %v256, %v257
    %s259 = scalar_lea.vmem [#allocation9], %s61
    %260 = vst [vmem:[%s259] sm:$0xff] %v258
    %v261 = vmul.f32 %v239, %v246
    %v262 = vmul.f32 %v243, %v247
    %v263 = vadd.f32 %v261, %v262
    %s264 = scalar_lea.vmem [#allocation9], %s64
    %265 = vst [vmem:[%s264] sm:$0xff] %v263
    %v266 = vmul.f32 %v239, %v250
    %v267 = vmul.f32 %v243, %v251
    %v268 = vadd.f32 %v266, %v267
    %s269 = scalar_lea.vmem [#allocation9], %s67
    %270 = vst [vmem:[%s269] sm:$0xff] %v268
    // Predicated region
    $region26: #{tpu_custom_call.1} parent=1 // pred_check
      _
    $region27: #{tpu_custom_call.1} parent=1 // pred_check_branch
      %272 = sbr.rel (0) target = $region29
    $region28: #{tpu_custom_call.1} parent=1 // pred_region
      %s274 = ssub.s32 512, 512
      %275 = vsyncadd [#allocation4], %s274
      %s276 = sshll.u32 [#allocation9], 4
      %s277 = int_to_ptr.vmem [resolvable:$true] %s276
      %282 = dma.vmem_to_hbm [thread:$0]  %s277, 512, %s3, [#allocation4], 128, 128, 8
    $region29: #{tpu_custom_call.1} parent=1 // pred_fallthru
      _
    // Predicated region
    $region30: #{tpu_custom_call.1} parent=1 // pred_check
      _
    $region31: #{tpu_custom_call.1} parent=1 // pred_check_branch
      %284 = sbr.rel (0) target = $region33
    $region32: #{tpu_custom_call.1} parent=1 // pred_region
      %285 = dma.done [#allocation4], 512
    $region33: #{tpu_custom_call.1} parent=1 // pred_fallthru
      _
    %286 = vsyncpa [#allocation3], 1
    %287 = vsyncpa [#allocation4], 1
    %288 = vsyncpa [#allocation5], 1
    %289 = vsyncpa [#allocation8], 1

</llo_original>
